<compile_context>
chip_gen: v7x
topology: tpu7x:2x2x1
jax: 0.10.0
libtpu: 0.0.40
codegen_flags: <defaults>
</compile_context>

<pallas_src>
import numpy as np
import jax
import jax.numpy as jnp
from jax import lax
from jax.experimental import pallas as pl
from jax.experimental.pallas import tpu as pltpu


# ----------------------------------------------------------------------------
# Synthetic deterministic class-relation DAG (replaces ClassRelations/networkx)
# ----------------------------------------------------------------------------
# sorted_nodes is already in topological order -> parent index < child index.
SORTED_NODES = [
    "root",      # 0
    "animal",    # 1  parent: root
    "vehicle",   # 2  parent: root
    "mammal",    # 3  parent: animal
    "bird",      # 4  parent: animal
    "car",       # 5  parent: vehicle
    "truck",     # 6  parent: vehicle
    "dog",       # 7  parent: mammal
    "cat",       # 8  parent: mammal
    "sparrow",   # 9  parent: bird
    "eagle",     # 10 parent: bird
    "sedan",     # 11 parent: car
    "suv",       # 12 parent: car
    "pickup",    # 13 parent: truck
]
PARENTS = {
    0: [], 1: [0], 2: [0], 3: [1], 4: [1], 5: [2], 6: [2],
    7: [3], 8: [3], 9: [4], 10: [4], 11: [5], 12: [5], 13: [6],
}
CLASS_NAMES = ["mammal", "bird", "car", "truck", "dog", "cat",
               "sparrow", "eagle", "sedan", "suv", "pickup"]
N_NODES = len(SORTED_NODES)
NAME_TO_IDX = {name: i for i, name in enumerate(SORTED_NODES)}

LANES = 128   # lane-pad the node axis so every vector op is a full vreg row
B_PAD = 8     # sublane-pad the batch axis


def _build_numpy_tables():
    n = N_NODES
    parent_mask = np.zeros((n, n), np.float32)   # parent_mask[child, parent] = 1
    child_mask = np.zeros((n, n), np.float32)    # child_mask[parent, child] = 1
    for c, ps in PARENTS.items():
        for p in ps:
            parent_mask[c, p] = 1.0
            child_mask[p, c] = 1.0

    # strict ancestor / descendant transitive closures
    anc = np.zeros((n, n), np.float32)
    for node in range(n):                        # topological order
        for p in PARENTS[node]:
            anc[node, p] = 1.0
            anc[node] = np.maximum(anc[node], anc[p])
    desc = anc.T.copy()

    # embedding table: one-hot(node) + ancestors(node)
    emb_table = np.minimum(np.eye(n, dtype=np.float32) + anc, 1.0)

    # loss-mask table: one-hot(node) + for each ancestor a: one-hot(a)+children(a)
    mask_table = np.eye(n, dtype=np.float32)
    for node in range(n):
        for a in range(n):
            if anc[node, a] > 0:
                mask_table[node, a] = 1.0
                mask_table[node] = np.maximum(mask_table[node], child_mask[a])
    mask_table = np.minimum(mask_table, 1.0)

    class_to_node = np.array([NAME_TO_IDX[c] for c in CLASS_NAMES], np.int32)
    class_node_mask = np.zeros((n,), np.float32)
    node_to_class = np.zeros((n,), np.int32)
    for ci, ni in enumerate(class_to_node):
        class_node_mask[ni] = 1.0
        node_to_class[ni] = ci

    return dict(parent_mask=parent_mask, desc=desc, emb_table=emb_table,
                mask_table=mask_table, class_to_node=class_to_node,
                class_node_mask=class_node_mask, node_to_class=node_to_class)


NP_TABLES = _build_numpy_tables()


def _build_structure_and_device_tables():
    """Bake DAG structure into trace-time constants + lane-padded device tables."""
    n = N_NODES
    # topological depth of every node (all parents are strictly shallower)
    depth = [0] * n
    for k in range(n):
        ps = PARENTS[k]
        depth[k] = 0 if not ps else 1 + max(depth[p] for p in ps)
    max_d = max(depth)
    levels = [[k for k in range(n) if depth[k] == d] for d in range(max_d + 1)]

    rows = []

    def add_mask(idxs):
        v = np.zeros((LANES,), np.float32)
        for i in idxs:
            v[int(i)] = 1.0
        rows.append(v)
        return len(rows) - 1

    row_root = add_mask(levels[0])                           # parentless nodes
    row_class = add_mask(list(NP_TABLES["class_to_node"]))   # class-node mask
    n2c = np.zeros((LANES,), np.float32)
    for ci, ni in enumerate(NP_TABLES["class_to_node"]):
        n2c[int(ni)] = float(ci)
    rows.append(n2c)
    row_n2c = len(rows) - 1

    # level_plan: [(level_mask_row, [(parent_idx, children_mask_row), ...]), ...]
    level_plan = []
    for d in range(1, max_d + 1):
        lm = add_mask(levels[d])
        parents = sorted({p for k in levels[d] for p in PARENTS[k]})
        pcs = []
        for p in parents:
            children = [k for k in levels[d] if p in PARENTS[k]]
            pcs.append((p, add_mask(children)))
        level_plan.append((lm, pcs))

    r_pad = ((len(rows) + 7) // 8) * 8
    const_mat = np.zeros((r_pad, LANES), np.float32)
    const_mat[:len(rows)] = np.stack(rows)

    desc_pad = np.zeros((LANES, LANES), np.float32)
    desc_pad[:n, :n] = NP_TABLES["desc"]
    embmask_pad = np.zeros((LANES, 2 * LANES), np.float32)   # [emb | loss-mask]
    embmask_pad[:n, :n] = NP_TABLES["emb_table"]
    embmask_pad[:n, LANES:LANES + n] = NP_TABLES["mask_table"]

    structure = dict(row_root=row_root, row_class=row_class, row_n2c=row_n2c,
                     level_plan=level_plan)
    device_tables = dict(const_mat=jnp.asarray(const_mat),
                         desc_pad=jnp.asarray(desc_pad),
                         embmask_pad=jnp.asarray(embmask_pad),
                         class_to_node=jnp.asarray(NP_TABLES["class_to_node"]))
    return structure, device_tables


STRUCTURE, TABLES = _build_structure_and_device_tables()


# ----------------------------------------------------------------------------
# Fused Pallas kernel
# ----------------------------------------------------------------------------
def _make_fused_kernel(batch, structure):
    row_root = structure["row_root"]
    row_class = structure["row_class"]
    row_n2c = structure["row_n2c"]
    level_plan = structure["level_plan"]
    inv_b = 1.0 / float(batch)

    def kernel(preds_ref, nt_ref, desc_ref, embmask_ref, const_ref,
               loss_ref, yhat_ref, uncond_ref):
        preds = preds_ref[...]                               # (B_PAD, LANES) f32
        const = const_ref[...]                               # (R, LANES)     f32
        lane_i = lax.broadcasted_iota(jnp.int32, preds.shape, 1)
        lane_f = lane_i.astype(jnp.float32)
        row_i = lax.broadcasted_iota(jnp.int32, preds.shape, 0)
        row_valid = (row_i < batch).astype(jnp.float32)      # mask padded rows

        def crow(r):
            return const[r:r + 1, :]                         # (1, LANES)

        # ---- DAG propagation of unconditional probabilities ----
        # Statically unrolled by topological level; state `u` stays in vregs
        # and is written to the output ref exactly once at the end.
        u = preds * crow(row_root)                           # parentless nodes
        for lm_row, pcs in level_plan:
            no_par = jnp.ones_like(u)
            for p, cm_row in pcs:                            # static parent ids
                no_par = no_par * (1.0 - u[:, p:p + 1] * crow(cm_row))
            u = u + crow(lm_row) * (preds * (1.0 - no_par))

        # ---- extrapolate ground truth: best class-descendant of target ----
        nt = nt_ref[...]                                     # (B_PAD, 1) int32
        nt_onehot = (lane_i == nt).astype(jnp.float32)       # (B_PAD, LANES)
        desc_rows = jnp.dot(nt_onehot, desc_ref[...],
                            preferred_element_type=jnp.float32)
        class_mask = crow(row_class)
        cand = desc_rows * class_mask
        has_cand = jnp.sum(cand, axis=1, keepdims=True) > 0.5

        def first_max_lane(scores):                          # first-occurrence argmax
            m = jnp.max(scores, axis=1, keepdims=True)
            idx = jnp.where(scores >= m, lane_f, float(LANES))
            return jnp.min(idx, axis=1, keepdims=True)       # (B_PAD, 1) f32

        # TODO(synk): original adds N(0, 1e-4) tie-break noise before ranking
        #             candidates; deterministic first-max is used instead.
        scores = jnp.where(cand > 0.5, u, -jnp.inf)
        best = first_max_lane(scores)
        gt_node = jnp.where(has_cand, best, nt.astype(jnp.float32))
        gt_onehot = (lane_f == gt_node).astype(jnp.float32)

        # ---- gather gt embedding + loss mask: one-hot @ [emb | mask] ----
        embmask = jnp.dot(gt_onehot, embmask_ref[...],
                          preferred_element_type=jnp.float32)  # (B_PAD, 2*LANES)
        gt_emb = embmask[:, :LANES]
        loss_mask = embmask[:, LANES:]

        # ---- masked BCE (binary targets -> single log per element) ----
        p = jnp.clip(preds, 1e-7, 1.0 - 1e-7)
        bce = -jnp.log(jnp.where(gt_emb > 0.5, p, 1.0 - p))
        loss_ref[0, 0] = jnp.sum(bce * loss_mask * row_valid) * inv_b

        # ---- deembed: predicted class = argmax uncond over class nodes ----
        class_scores = jnp.where(class_mask > 0.5, u, -jnp.inf)
        y_node = first_max_lane(class_scores)
        y_onehot = (lane_f == y_node).astype(jnp.float32)
        y_class = jnp.sum(y_onehot * crow(row_n2c), axis=1, keepdims=True)
        yhat_ref[...] = y_class.astype(jnp.int32)

        uncond_ref[...] = u

    return kernel


# ----------------------------------------------------------------------------
# Forward wrapper (only trivial glue: lane/row padding + class->node lookup)
# ----------------------------------------------------------------------------
def relation_loss_forward(preds, targets, tables):
    B, N = preds.shape
    assert B <= B_PAD and N <= LANES

    preds_pad = jnp.zeros((B_PAD, LANES), jnp.float32).at[:B, :N].set(preds)
    nt = tables["class_to_node"][targets]                    # (B,) target node ids
    nt_pad = jnp.zeros((B_PAD, 1), jnp.int32).at[:B, 0].set(nt)

    vmem = pl.BlockSpec(memory_space=pltpu.MemorySpace.VMEM)
    smem = pl.BlockSpec(memory_space=pltpu.MemorySpace.SMEM)

    # TODO(synk): for production batch sizes, add a batch-tile grid
    # (BlockSpec((B_TILE, LANES), lambda i: (i, 0)),
    #  dimension_semantics=("parallel",)) so v7x's two TensorCores both work,
    # sizing tiles against v7x's 64 MiB VMEM.
    loss, yhat, uncond = pl.pallas_call(
        _make_fused_kernel(B, STRUCTURE),
        out_shape=(jax.ShapeDtypeStruct((1, 1), jnp.float32),        # loss (SMEM)
                   jax.ShapeDtypeStruct((B_PAD, 1), jnp.int32),      # y_hat
                   jax.ShapeDtypeStruct((B_PAD, LANES), jnp.float32)),  # uncond
        in_specs=[vmem, vmem, vmem, vmem, vmem],
        out_specs=(smem, vmem, vmem),
    )(preds_pad, nt_pad, tables["desc_pad"], tables["embmask_pad"],
      tables["const_mat"])

    return loss[0, 0], yhat[:B, 0], uncond[:B, :N]


# ----------------------------------------------------------------------------
# Pure numpy reference (mirrors the PyTorch module, tie-break noise dropped)
# ----------------------------------------------------------------------------
def _reference(preds, targets):
    preds = np.asarray(preds, np.float64)
    targets = np.asarray(targets)
    t = NP_TABLES
    B = preds.shape[0]
    n = N_NODES

    uncond = np.zeros((B, n))
    for b in range(B):
        for k in range(n):
            ps = PARENTS[k]
            if not ps:
                uncond[b, k] = preds[b, k]
            else:
                no_par = 1.0
                for p in ps:
                    no_par *= 1.0 - uncond[b, p]
                uncond[b, k] = preds[b, k] * (1.0 - no_par)

    gt_node = np.zeros((B,), np.int64)
    for b in range(B):
        nt = int(t["class_to_node"][targets[b]])
        cand = t["desc"][nt] * t["class_node_mask"]
        if cand.sum() > 0:
            sc = np.where(cand > 0, uncond[b], -np.inf)
            gt_node[b] = int(np.argmax(sc))
        else:
            gt_node[b] = nt

    g = t["emb_table"][gt_node]
    m = t["mask_table"][gt_node]
    p = np.clip(preds, 1e-7, 1.0 - 1e-7)
    bce = -(g * np.log(p) + (1.0 - g) * np.log(1.0 - p))
    loss = np.mean(np.sum(bce * m, axis=1))

    y_hat = np.zeros((B,), np.int64)
    for b in range(B):
        sc = np.where(t["class_node_mask"] > 0, uncond[b], -np.inf)
        y_hat[b] = int(t["node_to_class"][int(np.argmax(sc))])
    return loss, y_hat, uncond


# ----------------------------------------------------------------------------
if __name__ == "__main__":
    B = 4
    key = jax.random.PRNGKey(0)
    # conditional per-node probabilities in (0, 1), shape (batch, n_nodes)
    preds = jax.random.uniform(key, (B, N_NODES), jnp.float32,
                               minval=0.05, maxval=0.95)
    targets = jnp.array([0, 3, 1, 7], jnp.int32)   # indices into CLASS_NAMES

    fwd = jax.jit(relation_loss_forward)
    loss, y_hat, uncond = fwd(preds, targets, TABLES)
    loss, y_hat, uncond = jax.block_until_ready((loss, y_hat, uncond))

    ref_loss, ref_yhat, ref_uncond = _reference(np.asarray(preds),
                                                np.asarray(targets))
    assert np.allclose(float(loss), ref_loss, rtol=1e-4, atol=1e-5), \
        (float(loss), ref_loss)
    assert np.array_equal(np.asarray(y_hat), ref_yhat), \
        (np.asarray(y_hat), ref_yhat)
    assert np.allclose(np.asarray(uncond), ref_uncond, rtol=1e-4, atol=1e-5)

    print("KERNEL_OK")
</pallas_src>

<mosaic_0001>
module attributes {stable_mosaic.version = 11 : i64} {
  func.func @kernel(%arg0: memref<8x128xf32, #tpu.memory_space<vmem>>, %arg1: memref<8x1xi32, #tpu.memory_space<vmem>>, %arg2: memref<128x128xf32, #tpu.memory_space<vmem>>, %arg3: memref<128x256xf32, #tpu.memory_space<vmem>>, %arg4: memref<16x128xf32, #tpu.memory_space<vmem>>, %arg5: memref<1x1xf32, #tpu.memory_space<smem>>, %arg6: memref<8x1xi32, #tpu.memory_space<vmem>>, %arg7: memref<8x128xf32, #tpu.memory_space<vmem>>) attributes {dimension_semantics = [], scalar_prefetch = 0 : i64, scratch_operands = 0 : i64, tpu.core_type = #tpu.core_type<tc>} {
    %c0 = arith.constant 0 : index
    %c0_0 = arith.constant 0 : index
    %0 = vector.load %arg0[%c0, %c0_0] : memref<8x128xf32, #tpu.memory_space<vmem>>, vector<8x128xf32>
    %c0_1 = arith.constant 0 : index
    %c0_2 = arith.constant 0 : index
    %1 = vector.load %arg4[%c0_1, %c0_2] : memref<16x128xf32, #tpu.memory_space<vmem>>, vector<16x128xf32>
    %2 = tpu.iota {dimensions = array<i32: 1>} : vector<8x128xi32>
    %3 = arith.sitofp %2 : vector<8x128xi32> to vector<8x128xf32>
    %4 = tpu.iota {dimensions = array<i32: 0>} : vector<8x128xi32>
    %c4_i32 = arith.constant 4 : i32
    %5 = vector.broadcast %c4_i32 : i32 to vector<8x128xi32>
    %6 = arith.cmpi slt, %4, %5 : vector<8x128xi32>
    %7 = arith.extui %6 : vector<8x128xi1> to vector<8x128xi32>
    %8 = arith.sitofp %7 : vector<8x128xi32> to vector<8x128xf32>
    %9 = vector.extract_strided_slice %1 {offsets = [0, 0], sizes = [1, 128], strides = [1, 1]} : vector<16x128xf32> to vector<1x128xf32>
    %10 = vector.broadcast %9 : vector<1x128xf32> to vector<8x128xf32>
    %11 = arith.mulf %0, %10 : vector<8x128xf32>
    %cst = arith.constant 1.000000e+00 : f32
    %12 = vector.broadcast %cst : f32 to vector<8x128xf32>
    %13 = vector.extract_strided_slice %11 {offsets = [0, 0], sizes = [8, 1], strides = [1, 1]} : vector<8x128xf32> to vector<8x1xf32>
    %14 = vector.extract_strided_slice %1 {offsets = [4, 0], sizes = [1, 128], strides = [1, 1]} : vector<16x128xf32> to vector<1x128xf32>
    %15 = vector.broadcast %13 : vector<8x1xf32> to vector<8x128xf32>
    %16 = vector.broadcast %14 : vector<1x128xf32> to vector<8x128xf32>
    %17 = arith.mulf %15, %16 : vector<8x128xf32>
    %cst_3 = arith.constant 1.000000e+00 : f32
    %18 = vector.broadcast %cst_3 : f32 to vector<8x128xf32>
    %19 = arith.subf %18, %17 : vector<8x128xf32>
    %20 = arith.mulf %12, %19 : vector<8x128xf32>
    %21 = vector.extract_strided_slice %1 {offsets = [3, 0], sizes = [1, 128], strides = [1, 1]} : vector<16x128xf32> to vector<1x128xf32>
    %cst_4 = arith.constant 1.000000e+00 : f32
    %22 = vector.broadcast %cst_4 : f32 to vector<8x128xf32>
    %23 = arith.subf %22, %20 : vector<8x128xf32>
    %24 = arith.mulf %0, %23 : vector<8x128xf32>
    %25 = vector.broadcast %21 : vector<1x128xf32> to vector<8x128xf32>
    %26 = arith.mulf %25, %24 : vector<8x128xf32>
    %27 = arith.addf %11, %26 : vector<8x128xf32>
    %cst_5 = arith.constant 1.000000e+00 : f32
    %28 = vector.broadcast %cst_5 : f32 to vector<8x128xf32>
    %29 = vector.extract_strided_slice %27 {offsets = [0, 1], sizes = [8, 1], strides = [1, 1]} : vector<8x128xf32> to vector<8x1xf32>
    %30 = vector.extract_strided_slice %1 {offsets = [6, 0], sizes = [1, 128], strides = [1, 1]} : vector<16x128xf32> to vector<1x128xf32>
    %31 = vector.broadcast %29 : vector<8x1xf32> to vector<8x128xf32>
    %32 = vector.broadcast %30 : vector<1x128xf32> to vector<8x128xf32>
    %33 = arith.mulf %31, %32 : vector<8x128xf32>
    %cst_6 = arith.constant 1.000000e+00 : f32
    %34 = vector.broadcast %cst_6 : f32 to vector<8x128xf32>
    %35 = arith.subf %34, %33 : vector<8x128xf32>
    %36 = arith.mulf %28, %35 : vector<8x128xf32>
    %37 = vector.extract_strided_slice %27 {offsets = [0, 2], sizes = [8, 1], strides = [1, 1]} : vector<8x128xf32> to vector<8x1xf32>
    %38 = vector.extract_strided_slice %1 {offsets = [7, 0], sizes = [1, 128], strides = [1, 1]} : vector<16x128xf32> to vector<1x128xf32>
    %39 = vector.broadcast %37 : vector<8x1xf32> to vector<8x128xf32>
    %40 = vector.broadcast %38 : vector<1x128xf32> to vector<8x128xf32>
    %41 = arith.mulf %39, %40 : vector<8x128xf32>
    %cst_7 = arith.constant 1.000000e+00 : f32
    %42 = vector.broadcast %cst_7 : f32 to vector<8x128xf32>
    %43 = arith.subf %42, %41 : vector<8x128xf32>
    %44 = arith.mulf %36, %43 : vector<8x128xf32>
    %45 = vector.extract_strided_slice %1 {offsets = [5, 0], sizes = [1, 128], strides = [1, 1]} : vector<16x128xf32> to vector<1x128xf32>
    %cst_8 = arith.constant 1.000000e+00 : f32
    %46 = vector.broadcast %cst_8 : f32 to vector<8x128xf32>
    %47 = arith.subf %46, %44 : vector<8x128xf32>
    %48 = arith.mulf %0, %47 : vector<8x128xf32>
    %49 = vector.broadcast %45 : vector<1x128xf32> to vector<8x128xf32>
    %50 = arith.mulf %49, %48 : vector<8x128xf32>
    %51 = arith.addf %27, %50 : vector<8x128xf32>
    %cst_9 = arith.constant 1.000000e+00 : f32
    %52 = vector.broadcast %cst_9 : f32 to vector<8x128xf32>
    %53 = vector.extract_strided_slice %51 {offsets = [0, 3], sizes = [8, 1], strides = [1, 1]} : vector<8x128xf32> to vector<8x1xf32>
    %54 = vector.extract_strided_slice %1 {offsets = [9, 0], sizes = [1, 128], strides = [1, 1]} : vector<16x128xf32> to vector<1x128xf32>
    %55 = vector.broadcast %53 : vector<8x1xf32> to vector<8x128xf32>
    %56 = vector.broadcast %54 : vector<1x128xf32> to vector<8x128xf32>
    %57 = arith.mulf %55, %56 : vector<8x128xf32>
    %cst_10 = arith.constant 1.000000e+00 : f32
    %58 = vector.broadcast %cst_10 : f32 to vector<8x128xf32>
    %59 = arith.subf %58, %57 : vector<8x128xf32>
    %60 = arith.mulf %52, %59 : vector<8x128xf32>
    %61 = vector.extract_strided_slice %51 {offsets = [0, 4], sizes = [8, 1], strides = [1, 1]} : vector<8x128xf32> to vector<8x1xf32>
    %62 = vector.extract_strided_slice %1 {offsets = [10, 0], sizes = [1, 128], strides = [1, 1]} : vector<16x128xf32> to vector<1x128xf32>
    %63 = vector.broadcast %61 : vector<8x1xf32> to vector<8x128xf32>
    %64 = vector.broadcast %62 : vector<1x128xf32> to vector<8x128xf32>
    %65 = arith.mulf %63, %64 : vector<8x128xf32>
    %cst_11 = arith.constant 1.000000e+00 : f32
    %66 = vector.broadcast %cst_11 : f32 to vector<8x128xf32>
    %67 = arith.subf %66, %65 : vector<8x128xf32>
    %68 = arith.mulf %60, %67 : vector<8x128xf32>
    %69 = vector.extract_strided_slice %51 {offsets = [0, 5], sizes = [8, 1], strides = [1, 1]} : vector<8x128xf32> to vector<8x1xf32>
    %70 = vector.extract_strided_slice %1 {offsets = [11, 0], sizes = [1, 128], strides = [1, 1]} : vector<16x128xf32> to vector<1x128xf32>
    %71 = vector.broadcast %69 : vector<8x1xf32> to vector<8x128xf32>
    %72 = vector.broadcast %70 : vector<1x128xf32> to vector<8x128xf32>
    %73 = arith.mulf %71, %72 : vector<8x128xf32>
    %cst_12 = arith.constant 1.000000e+00 : f32
    %74 = vector.broadcast %cst_12 : f32 to vector<8x128xf32>
    %75 = arith.subf %74, %73 : vector<8x128xf32>
    %76 = arith.mulf %68, %75 : vector<8x128xf32>
    %77 = vector.extract_strided_slice %51 {offsets = [0, 6], sizes = [8, 1], strides = [1, 1]} : vector<8x128xf32> to vector<8x1xf32>
    %78 = vector.extract_strided_slice %1 {offsets = [12, 0], sizes = [1, 128], strides = [1, 1]} : vector<16x128xf32> to vector<1x128xf32>
    %79 = vector.broadcast %77 : vector<8x1xf32> to vector<8x128xf32>
    %80 = vector.broadcast %78 : vector<1x128xf32> to vector<8x128xf32>
    %81 = arith.mulf %79, %80 : vector<8x128xf32>
    %cst_13 = arith.constant 1.000000e+00 : f32
    %82 = vector.broadcast %cst_13 : f32 to vector<8x128xf32>
    %83 = arith.subf %82, %81 : vector<8x128xf32>
    %84 = arith.mulf %76, %83 : vector<8x128xf32>
    %85 = vector.extract_strided_slice %1 {offsets = [8, 0], sizes = [1, 128], strides = [1, 1]} : vector<16x128xf32> to vector<1x128xf32>
    %cst_14 = arith.constant 1.000000e+00 : f32
    %86 = vector.broadcast %cst_14 : f32 to vector<8x128xf32>
    %87 = arith.subf %86, %84 : vector<8x128xf32>
    %88 = arith.mulf %0, %87 : vector<8x128xf32>
    %89 = vector.broadcast %85 : vector<1x128xf32> to vector<8x128xf32>
    %90 = arith.mulf %89, %88 : vector<8x128xf32>
    %91 = arith.addf %51, %90 : vector<8x128xf32>
    %c0_15 = arith.constant 0 : index
    %c0_16 = arith.constant 0 : index
    %92 = vector.load %arg1[%c0_15, %c0_16] : memref<8x1xi32, #tpu.memory_space<vmem>>, vector<8x1xi32>
    %93 = vector.broadcast %92 : vector<8x1xi32> to vector<8x128xi32>
    %94 = arith.cmpi eq, %2, %93 : vector<8x128xi32>
    %95 = arith.extui %94 : vector<8x128xi1> to vector<8x128xi32>
    %96 = arith.sitofp %95 : vector<8x128xi32> to vector<8x128xf32>
    %c0_17 = arith.constant 0 : index
    %c0_18 = arith.constant 0 : index
    %97 = vector.load %arg2[%c0_17, %c0_18] : memref<128x128xf32, #tpu.memory_space<vmem>>, vector<128x128xf32>
    %cst_19 = arith.constant dense<0.000000e+00> : vector<8x128xf32>
    %98 = tpu.matmul %96, %97, %cst_19 {dimension_numbers = #tpu.dot_dimension_numbers<[1], [0], [0], [1], [0, 0, 1, 1], [], []>} : vector<8x128xf32>, vector<128x128xf32>, vector<8x128xf32> -> vector<8x128xf32>
    %99 = vector.extract_strided_slice %1 {offsets = [1, 0], sizes = [1, 128], strides = [1, 1]} : vector<16x128xf32> to vector<1x128xf32>
    %100 = vector.broadcast %99 : vector<1x128xf32> to vector<8x128xf32>
    %101 = arith.mulf %98, %100 : vector<8x128xf32>
    %cst_20 = arith.constant dense<0.000000e+00> : vector<8xf32>
    %102 = vector.multi_reduction <add>, %101, %cst_20 [1] : vector<8x128xf32> to vector<8xf32>
    %103 = vector.shape_cast %102 : vector<8xf32> to vector<8x1xf32>
    %cst_21 = arith.constant 5.000000e-01 : f32
    %104 = vector.broadcast %cst_21 : f32 to vector<8x1xf32>
    %105 = arith.cmpf ogt, %103, %104 : vector<8x1xf32>
    %cst_22 = arith.constant 5.000000e-01 : f32
    %106 = vector.broadcast %cst_22 : f32 to vector<8x128xf32>
    %107 = arith.cmpf ogt, %101, %106 : vector<8x128xf32>
    %cst_23 = arith.constant 0xFF800000 : f32
    %108 = vector.broadcast %cst_23 : f32 to vector<8x128xf32>
    %109 = arith.select %107, %91, %108 : vector<8x128xi1>, vector<8x128xf32>
    %cst_24 = arith.constant dense<0xFF800000> : vector<8xf32>
    %110 = vector.multi_reduction <maximumf>, %109, %cst_24 [1] : vector<8x128xf32> to vector<8xf32>
    %111 = vector.shape_cast %110 : vector<8xf32> to vector<8x1xf32>
    %112 = vector.broadcast %111 : vector<8x1xf32> to vector<8x128xf32>
    %113 = arith.cmpf oge, %109, %112 : vector<8x128xf32>
    %cst_25 = arith.constant 1.280000e+02 : f32
    %114 = vector.broadcast %cst_25 : f32 to vector<8x128xf32>
    %115 = arith.select %113, %3, %114 : vector<8x128xi1>, vector<8x128xf32>
    %cst_26 = arith.constant dense<0x7F800000> : vector<8xf32>
    %116 = vector.multi_reduction <minimumf>, %115, %cst_26 [1] : vector<8x128xf32> to vector<8xf32>
    %117 = vector.shape_cast %116 : vector<8xf32> to vector<8x1xf32>
    %118 = arith.sitofp %92 : vector<8x1xi32> to vector<8x1xf32>
    %119 = arith.select %105, %117, %118 : vector<8x1xi1>, vector<8x1xf32>
    %120 = vector.broadcast %119 : vector<8x1xf32> to vector<8x128xf32>
    %121 = arith.cmpf oeq, %3, %120 : vector<8x128xf32>
    %122 = arith.extui %121 : vector<8x128xi1> to vector<8x128xi32>
    %123 = arith.sitofp %122 : vector<8x128xi32> to vector<8x128xf32>
    %c0_27 = arith.constant 0 : index
    %c0_28 = arith.constant 0 : index
    %124 = vector.load %arg3[%c0_27, %c0_28] : memref<128x256xf32, #tpu.memory_space<vmem>>, vector<128x256xf32>
    %cst_29 = arith.constant dense<0.000000e+00> : vector<8x256xf32>
    %125 = tpu.matmul %123, %124, %cst_29 {dimension_numbers = #tpu.dot_dimension_numbers<[1], [0], [0], [1], [0, 0, 1, 1], [], []>} : vector<8x128xf32>, vector<128x256xf32>, vector<8x256xf32> -> vector<8x256xf32>
    %126 = vector.extract_strided_slice %125 {offsets = [0, 0], sizes = [8, 128], strides = [1, 1]} : vector<8x256xf32> to vector<8x128xf32>
    %127 = vector.extract_strided_slice %125 {offsets = [0, 128], sizes = [8, 128], strides = [1, 1]} : vector<8x256xf32> to vector<8x128xf32>
    %cst_30 = arith.constant 1.000000e-07 : f32
    %cst_31 = arith.constant 0.99999988 : f32
    %128 = vector.broadcast %cst_30 : f32 to vector<8x128xf32>
    %129 = arith.maximumf %128, %0 : vector<8x128xf32>
    %130 = vector.broadcast %cst_31 : f32 to vector<8x128xf32>
    %131 = arith.minimumf %130, %129 : vector<8x128xf32>
    %cst_32 = arith.constant 5.000000e-01 : f32
    %132 = vector.broadcast %cst_32 : f32 to vector<8x128xf32>
    %133 = arith.cmpf ogt, %126, %132 : vector<8x128xf32>
    %cst_33 = arith.constant 1.000000e+00 : f32
    %134 = vector.broadcast %cst_33 : f32 to vector<8x128xf32>
    %135 = arith.subf %134, %131 : vector<8x128xf32>
    %136 = arith.select %133, %131, %135 : vector<8x128xi1>, vector<8x128xf32>
    %137 = math.log %136 : vector<8x128xf32>
    %cst_34 = arith.constant 0.000000e+00 : f32
    %138 = vector.broadcast %cst_34 : f32 to vector<8x128xf32>
    %139 = arith.subf %138, %137 : vector<8x128xf32>
    %140 = arith.mulf %139, %127 : vector<8x128xf32>
    %141 = arith.mulf %140, %8 : vector<8x128xf32>
    %142 = vector.shape_cast %141 : vector<8x128xf32> to vector<1x8x128xf32>
    %cst_35 = arith.constant dense<0.000000e+00> : vector<1xf32>
    %143 = vector.multi_reduction <add>, %142, %cst_35 [1, 2] : vector<1x8x128xf32> to vector<1xf32>
    %144 = vector.shape_cast %143 : vector<1xf32> to vector<1x1x1xf32>
    %145 = vector.extract %144[0, 0, 0] : f32 from vector<1x1x1xf32>
    %cst_36 = arith.constant 2.500000e-01 : f32
    %146 = arith.mulf %145, %cst_36 : f32
    %c0_37 = arith.constant 0 : index
    %c0_38 = arith.constant 0 : index
    %147 = memref.load %arg5[%c0_37, %c0_38] : memref<1x1xf32, #tpu.memory_space<smem>>
    memref.store %146, %arg5[%c0_37, %c0_38] : memref<1x1xf32, #tpu.memory_space<smem>>
    %cst_39 = arith.constant 5.000000e-01 : f32
    %148 = vector.broadcast %cst_39 : f32 to vector<1x128xf32>
    %149 = arith.cmpf ogt, %99, %148 : vector<1x128xf32>
    %cst_40 = arith.constant 0xFF800000 : f32
    %150 = vector.shape_cast %149 : vector<1x128xi1> to vector<1x128xi1>
    %151 = vector.broadcast %150 : vector<1x128xi1> to vector<8x128xi1>
    %152 = vector.broadcast %cst_40 : f32 to vector<8x128xf32>
    %153 = arith.select %151, %91, %152 : vector<8x128xi1>, vector<8x128xf32>
    %cst_41 = arith.constant dense<0xFF800000> : vector<8xf32>
    %154 = vector.multi_reduction <maximumf>, %153, %cst_41 [1] : vector<8x128xf32> to vector<8xf32>
    %155 = vector.shape_cast %154 : vector<8xf32> to vector<8x1xf32>
    %156 = vector.broadcast %155 : vector<8x1xf32> to vector<8x128xf32>
    %157 = arith.cmpf oge, %153, %156 : vector<8x128xf32>
    %cst_42 = arith.constant 1.280000e+02 : f32
    %158 = vector.broadcast %cst_42 : f32 to vector<8x128xf32>
    %159 = arith.select %157, %3, %158 : vector<8x128xi1>, vector<8x128xf32>
    %cst_43 = arith.constant dense<0x7F800000> : vector<8xf32>
    %160 = vector.multi_reduction <minimumf>, %159, %cst_43 [1] : vector<8x128xf32> to vector<8xf32>
    %161 = vector.shape_cast %160 : vector<8xf32> to vector<8x1xf32>
    %162 = vector.broadcast %161 : vector<8x1xf32> to vector<8x128xf32>
    %163 = arith.cmpf oeq, %3, %162 : vector<8x128xf32>
    %164 = arith.extui %163 : vector<8x128xi1> to vector<8x128xi32>
    %165 = arith.sitofp %164 : vector<8x128xi32> to vector<8x128xf32>
    %166 = vector.extract_strided_slice %1 {offsets = [2, 0], sizes = [1, 128], strides = [1, 1]} : vector<16x128xf32> to vector<1x128xf32>
    %167 = vector.broadcast %166 : vector<1x128xf32> to vector<8x128xf32>
    %168 = arith.mulf %165, %167 : vector<8x128xf32>
    %cst_44 = arith.constant dense<0.000000e+00> : vector<8xf32>
    %169 = vector.multi_reduction <add>, %168, %cst_44 [1] : vector<8x128xf32> to vector<8xf32>
    %170 = vector.shape_cast %169 : vector<8xf32> to vector<8x1xf32>
    %171 = arith.fptosi %170 : vector<8x1xf32> to vector<8x1xi32>
    %c0_45 = arith.constant 0 : index
    %c0_46 = arith.constant 0 : index
    %172 = vector.load %arg6[%c0_45, %c0_46] : memref<8x1xi32, #tpu.memory_space<vmem>>, vector<8x1xi32>
    tpu.vector_store %arg6[%c0_45, %c0_46], %171 {strides = array<i32>} : memref<8x1xi32, #tpu.memory_space<vmem>>, vector<8x1xi32>,
    %c0_47 = arith.constant 0 : index
    %c0_48 = arith.constant 0 : index
    %173 = vector.load %arg7[%c0_47, %c0_48] : memref<8x128xf32, #tpu.memory_space<vmem>>, vector<8x128xf32>
    tpu.vector_store %arg7[%c0_47, %c0_48], %91 {strides = array<i32>} : memref<8x128xf32, #tpu.memory_space<vmem>>, vector<8x128xf32>,
    return
  }
}

</mosaic_0001>

<llo_original>
// kernel: relation_loss_forward.1
$region0: #{relation_loss_forward.1}
  #allocation0 [shape = 'u32[]', space=smem, size = 0x4, offset = 0x4, fixed_abs, tag = 'smem constant byte address 0x4 - core index']
  #allocation1 [shape = 'u32[144,128]{1,0:T(1,128)}', space=vmem, size = 0x12000, scoped, tag = 'internal scratch']
  %s0 = inlined_call_operand.vmem [shape: f32[8,128], index: 0, kind: input, shape index: {}]
  %s1 = inlined_call_operand.vmem [shape: s32[8,1], index: 1, kind: input, shape index: {}]
  %s2 = inlined_call_operand.vmem [shape: f32[128,128], index: 2, kind: input, shape index: {}]
  %s3 = inlined_call_operand.vmem [shape: f32[128,256], index: 3, kind: input, shape index: {}]
  %s4 = inlined_call_operand.vmem [shape: f32[16,128], index: 4, kind: input, shape index: {}]
  %s5 = inlined_call_operand.hbm [shape: f32[1,1], index: 5, kind: output, shape index: {0}]
  %s6 = inlined_call_operand.vmem [shape: s32[8,1], index: 6, kind: output, shape index: {1}]
  %s7 = inlined_call_operand.vmem [shape: f32[8,128], index: 7, kind: output, shape index: {2}]
  %8 = xla_tuple %s5, %s6, %s7
  %s9 = sld [smem:[#allocation0]]
  $region46: #{relation_loss_forward.1} parent=0
    _
  %s11 = ssub.s32 1, %s9
  %s12 = scalar_select 0, %s11, %s9
  $region1: #{relation_loss_forward.1} parent=0
    #allocation2 [shape = 'u8[512]{0}', space=smem, size = 0x200, scoped, tag = 'output window, operand 0, single buffered']
    #allocation3 [shape = 's32[1]{0}', space=sflag, size = 0x4, scoped, tag = 'scoped memory for relation_loss_forward.1']
    %13 = vsyncpa [#allocation3], 0
    // Predicated region
    $region2: #{relation_loss_forward.1} parent=1 // pred_check
      _
    $region3: #{relation_loss_forward.1} parent=1 // pred_check_branch
      %15 = sbr.rel (0) target = $region5
    $region4: #{relation_loss_forward.1} parent=1 // pred_region
      _
    $region5: #{relation_loss_forward.1} parent=1 // pred_fallthru
      _
    // Predicated region
    $region6: #{relation_loss_forward.1} parent=1 // pred_check
      _
    $region7: #{relation_loss_forward.1} parent=1 // pred_check_branch
      %17 = sbr.rel (0) target = $region9
    $region8: #{relation_loss_forward.1} parent=1 // pred_region
      _
    $region9: #{relation_loss_forward.1} parent=1 // pred_fallthru
      _
    // Predicated region
    $region10: #{relation_loss_forward.1} parent=1 // pred_check
      _
    $region11: #{relation_loss_forward.1} parent=1 // pred_check_branch
      %19 = sbr.rel (0) target = $region13
    $region12: #{relation_loss_forward.1} parent=1 // pred_region
      _
    $region13: #{relation_loss_forward.1} parent=1 // pred_fallthru
      _
    // Predicated region
    $region14: #{relation_loss_forward.1} parent=1 // pred_check
      _
    $region15: #{relation_loss_forward.1} parent=1 // pred_check_branch
      %21 = sbr.rel (0) target = $region17
    $region16: #{relation_loss_forward.1} parent=1 // pred_region
      _
    $region17: #{relation_loss_forward.1} parent=1 // pred_fallthru
      _
    // Predicated region
    $region18: #{relation_loss_forward.1} parent=1 // pred_check
      _
    $region19: #{relation_loss_forward.1} parent=1 // pred_check_branch
      %23 = sbr.rel (0) target = $region21
    $region20: #{relation_loss_forward.1} parent=1 // pred_region
      _
    $region21: #{relation_loss_forward.1} parent=1 // pred_fallthru
      _
    %v24 = vld [vmem:[%s0] sm:$0xff]
    %v25 = vld [vmem:[%s4] sm:$0xff]
    %v26 = vld [vmem:[%s4 + $0x8] sm:$0xff]
    %v27 = vlaneseq
    %v28 = vand.u32 %v27, 127
    %v29 = vcvt.s32.f32 %v28
    %v30 = vlaneseq
    %v31 = vshrl.u32 %v30, 7
    %vm32 = vcmp.lt.s32.totalorder %v31, 4
    %v33 = vsel %vm32, 1, 0
    %v34 = vcvt.s32.f32 %v33
    %v35 = vlaneseq
    %v36 = vshrl.u32 %v35, 7
    %v37 = vsub.s32 0, %v36
    %v38 = vrot.slane %v25, %v37
    %v39 = vmul.f32 %v24, %v38
    %41 = vset.pattern.permute.xlu0 0
    %42 = vperm.xlu0 %41, %v39
    %v43 = vpop.permute.xlu0 %42
    %v45 = vlaneseq
    %v46 = vshrl.u32 %v45, 7
    %v47 = vsub.s32 4, %v46
    %v48 = vrot.slane %v25, %v47
    %v49 = vmul.f32 %v43, %v48
    %v50 = vsub.f32 1.0, %v49
    %v51 = vsub.f32 1.0, %v50
    %v52 = vmul.f32 %v24, %v51
    %v53 = vlaneseq
    %v54 = vshrl.u32 %v53, 7
    %v55 = vsub.s32 3, %v54
    %v56 = vrot.slane %v25, %v55
    %v57 = vmul.f32 %v56, %v52
    %v58 = vadd.f32 %v39, %v57
    %60 = vset.pattern.permute.xlu0 1
    %61 = vperm.xlu0 %60, %v58
    %v62 = vpop.permute.xlu0 %61
    %v64 = vlaneseq
    %v65 = vshrl.u32 %v64, 7
    %v66 = vsub.s32 6, %v65
    %v67 = vrot.slane %v25, %v66
    %v68 = vmul.f32 %v62, %v67
    %v69 = vsub.f32 1.0, %v68
    %70 = vset.pattern.permute.xlu0 2
    %71 = vperm.xlu0 %70, %v58
    %v72 = vpop.permute.xlu0 %71
    %v74 = vlaneseq
    %v75 = vshrl.u32 %v74, 7
    %v76 = vsub.s32 7, %v75
    %v77 = vrot.slane %v25, %v76
    %v78 = vmul.f32 %v72, %v77
    %v79 = vsub.f32 1.0, %v78
    %v80 = vmul.f32 %v69, %v79
    %v81 = vsub.f32 1.0, %v80
    %v82 = vmul.f32 %v24, %v81
    %v83 = vlaneseq
    %v84 = vshrl.u32 %v83, 7
    %v85 = vsub.s32 5, %v84
    %v86 = vrot.slane %v25, %v85
    %v87 = vmul.f32 %v86, %v82
    %v88 = vadd.f32 %v58, %v87
    %90 = vset.pattern.permute.xlu0 3
    %91 = vperm.xlu0 %90, %v88
    %v92 = vpop.permute.xlu0 %91
    %v94 = vlaneseq
    %v95 = vshrl.u32 %v94, 7
    %v96 = vsub.s32 1, %v95
    %v97 = vrot.slane %v26, %v96
    %v98 = vmul.f32 %v92, %v97
    %v99 = vsub.f32 1.0, %v98
    %100 = vset.pattern.permute.xlu0 4
    %101 = vperm.xlu0 %100, %v88
    %v102 = vpop.permute.xlu0 %101
    %v104 = vlaneseq
    %v105 = vshrl.u32 %v104, 7
    %v106 = vsub.s32 2, %v105
    %v107 = vrot.slane %v26, %v106
    %v108 = vmul.f32 %v102, %v107
    %v109 = vsub.f32 1.0, %v108
    %v110 = vmul.f32 %v99, %v109
    %111 = vset.pattern.permute.xlu0 5
    %112 = vperm.xlu0 %111, %v88
    %v113 = vpop.permute.xlu0 %112
    %v115 = vlaneseq
    %v116 = vshrl.u32 %v115, 7
    %v117 = vsub.s32 3, %v116
    %v118 = vrot.slane %v26, %v117
    %v119 = vmul.f32 %v113, %v118
    %v120 = vsub.f32 1.0, %v119
    %v121 = vmul.f32 %v110, %v120
    %122 = vset.pattern.permute.xlu0 6
    %123 = vperm.xlu0 %122, %v88
    %v124 = vpop.permute.xlu0 %123
    %v126 = vlaneseq
    %v127 = vshrl.u32 %v126, 7
    %v128 = vsub.s32 4, %v127
    %v129 = vrot.slane %v26, %v128
    %v130 = vmul.f32 %v124, %v129
    %v131 = vsub.f32 1.0, %v130
    %v132 = vmul.f32 %v121, %v131
    %v133 = vsub.f32 1.0, %v132
    %v134 = vmul.f32 %v24, %v133
    %v135 = vlaneseq
    %v136 = vshrl.u32 %v135, 7
    %v137 = vsub.s32 0, %v136
    %v138 = vrot.slane %v26, %v137
    %v139 = vmul.f32 %v138, %v134
    %v140 = vadd.f32 %v88, %v139
    %v141 = vld [vmem:[%s1] sm:$0xff]
    %142 = vset.pattern.permute.xlu0 0
    %143 = vperm.xlu0 %142, %v141
    %v144 = vpop.permute.xlu0 %143
    %vm145 = vcmp.eq.s32.totalorder %v28, %v144
    %v146 = vsel %vm145, 1, 0
    %v147 = vcvt.s32.f32 %v146
    %v148 = vld [vmem:[%s2] sm:$0xff]
    %v149 = vld [vmem:[%s2 + $0x8] sm:$0xff]
    %v150 = vld [vmem:[%s2 + $0x10] sm:$0xff]
    %v151 = vld [vmem:[%s2 + $0x18] sm:$0xff]
    %v152 = vld [vmem:[%s2 + $0x20] sm:$0xff]
    %v153 = vld [vmem:[%s2 + $0x28] sm:$0xff]
    %v154 = vld [vmem:[%s2 + $0x30] sm:$0xff]
    %v155 = vld [vmem:[%s2 + $0x38] sm:$0xff]
    %v156 = vld [vmem:[%s2 + $0x40] sm:$0xff]
    %v157 = vld [vmem:[%s2 + $0x48] sm:$0xff]
    %v158 = vld [vmem:[%s2 + $0x50] sm:$0xff]
    %v159 = vld [vmem:[%s2 + $0x58] sm:$0xff]
    %v160 = vld [vmem:[%s2 + $0x60] sm:$0xff]
    %v161 = vld [vmem:[%s2 + $0x68] sm:$0xff]
    %v162 = vld [vmem:[%s2 + $0x70] sm:$0xff]
    %v163 = vld [vmem:[%s2 + $0x78] sm:$0xff]
    %164 = vmatprep.subr.mxu0 0.0
    %165 = vmatpush1.msra.mxu0 %v148
    %166 = vmatprep.subr.mxu0 0.0
    %167 = vmatpush1.msra.mxu0 %v149
    %168 = vmatprep.subr.mxu0 0.0
    %169 = vmatpush1.msra.mxu0 %v150
    %170 = vmatprep.subr.mxu0 0.0
    %171 = vmatpush1.msra.mxu0 %v151
    %172 = vmatprep.subr.mxu0 0.0
    %173 = vmatpush1.msra.mxu0 %v152
    %174 = vmatprep.subr.mxu0 0.0
    %175 = vmatpush1.msra.mxu0 %v153
    %176 = vmatprep.subr.mxu0 0.0
    %177 = vmatpush1.msra.mxu0 %v154
    %178 = vmatprep.subr.mxu0 0.0
    %179 = vmatpush1.msra.mxu0 %v155
    %180 = vmatprep.subr.mxu0 0.0
    %181 = vmatpush1.msra.mxu0 %v156
    %182 = vmatprep.subr.mxu0 0.0
    %183 = vmatpush1.msra.mxu0 %v157
    %184 = vmatprep.subr.mxu0 0.0
    %185 = vmatpush1.msra.mxu0 %v158
    %186 = vmatprep.subr.mxu0 0.0
    %187 = vmatpush1.msra.mxu0 %v159
    %188 = vmatprep.subr.mxu0 0.0
    %189 = vmatpush1.msra.mxu0 %v160
    %190 = vmatprep.subr.mxu0 0.0
    %191 = vmatpush1.msra.mxu0 %v161
    %192 = vmatprep.subr.mxu0 0.0
    %193 = vmatpush1.msra.mxu0 %v162
    %194 = vmatprep.subr.mxu0 0.0
    %195 = vmatpush1.msra.mxu0 %v163
    %196 = vmatprep.subr.mxu0 0.0
    %197 = vmatpush1.msra.mxu0 0.0
    %198 = vmatprep.subr.mxu0 0.0
    %199 = vmatpush1.msra.mxu0 0.0
    %200 = vmatprep.subr.mxu0 0.0
    %201 = vmatpush1.msra.mxu0 0.0
    %202 = vmatprep.subr.mxu0 0.0
    %203 = vmatpush1.msra.mxu0 0.0
    %204 = vmatprep.subr.mxu0 0.0
    %205 = vmatpush1.msra.mxu0 0.0
    %206 = vmatprep.subr.mxu0 0.0
    %207 = vmatpush1.msra.mxu0 0.0
    %208 = vmatprep.subr.mxu0 0.0
    %209 = vmatpush1.msra.mxu0 0.0
    %210 = vmatprep.subr.mxu0 0.0
    %211 = vmatpush1.msra.mxu0 0.0
    %212 = vmatprep.subr.mxu0 0.0
    %213 = vmatpush1.msra.mxu0 0.0
    %214 = vmatprep.subr.mxu0 0.0
    %215 = vmatpush1.msra.mxu0 0.0
    %216 = vmatprep.subr.mxu0 0.0
    %217 = vmatpush1.msra.mxu0 0.0
    %218 = vmatprep.subr.mxu0 0.0
    %219 = vmatpush1.msra.mxu0 0.0
    %220 = vmatprep.subr.mxu0 0.0
    %221 = vmatpush1.msra.mxu0 0.0
    %222 = vmatprep.subr.mxu0 0.0
    %223 = vmatpush1.msra.mxu0 0.0
    %224 = vmatprep.subr.mxu0 0.0
    %225 = vmatpush1.msra.mxu0 0.0
    %226 = vmatprep.subr.mxu0 0.0
    %227 = vmatpush1.msra.mxu0 0.0
    %228 = vmatprep.mubr.f32.mxu0 0.0
    %229 = vmatmul.mubr.f32.gmra.mrb[0].mxu0 %v147
    %v230 = vpop.f32.mrb[0].mxu0
    %v231 = vadd.f32 0.0, %v230
    %v232 = vpop.f32.mrb[0].mxu0
    %233 = vdwg.mxu0
    %v234 = vlaneseq
    %v235 = vshrl.u32 %v234, 7
    %v236 = vsub.s32 1, %v235
    %v237 = vrot.slane %v25, %v236
    %v238 = vmul.f32 %v231, %v237
    %239 = vadd.xlane.f32.xlu0 %v238
    %v240 = vpop.xlane.xlu0 %239
    %vm241 = vcmp.gt.f32.partialorder %v240, 0.5
    %vm242 = vcmp.gt.f32.partialorder %v238, 0.5
    %v243 = vsel %vm242, %v140, -inf
    %244 = vmax.xlane.f32.xlu0 %v243
    %v245 = vpop.xlane.xlu0 %244
    %vm246 = vcmp.ge.f32.partialorder %v243, %v245
    %v247 = vsel %vm246, %v29, 128.0
    %248 = vmin.xlane.f32.xlu0 %v247
    %v249 = vpop.xlane.xlu0 %248
    %v250 = vcvt.s32.f32 %v141
    %v251 = vsel %vm241, %v249, %v250
    %253 = vset.pattern.permute.xlu0 0
    %254 = vperm.xlu0 %253, %v251
    %v255 = vpop.permute.xlu0 %254
    %vm257 = vcmp.eq.f32.partialorder %v29, %v255
    %v258 = vsel %vm257, 1, 0
    %v259 = vcvt.s32.f32 %v258
    %v260 = vld [vmem:[%s3] sm:$0xff]
    %v261 = vld [vmem:[%s3 + $0x8] sm:$0xff]
    %v262 = vld [vmem:[%s3 + $0x10] sm:$0xff]
    %v263 = vld [vmem:[%s3 + $0x18] sm:$0xff]
    %v264 = vld [vmem:[%s3 + $0x20] sm:$0xff]
    %v265 = vld [vmem:[%s3 + $0x28] sm:$0xff]
    %v266 = vld [vmem:[%s3 + $0x30] sm:$0xff]
    %v267 = vld [vmem:[%s3 + $0x38] sm:$0xff]
    %v268 = vld [vmem:[%s3 + $0x40] sm:$0xff]
    %v269 = vld [vmem:[%s3 + $0x48] sm:$0xff]
    %v270 = vld [vmem:[%s3 + $0x50] sm:$0xff]
    %v271 = vld [vmem:[%s3 + $0x58] sm:$0xff]
    %v272 = vld [vmem:[%s3 + $0x60] sm:$0xff]
    %v273 = vld [vmem:[%s3 + $0x68] sm:$0xff]
    %v274 = vld [vmem:[%s3 + $0x70] sm:$0xff]
    %v275 = vld [vmem:[%s3 + $0x78] sm:$0xff]
    %v276 = vld [vmem:[%s3 + $0x80] sm:$0xff]
    %v277 = vld [vmem:[%s3 + $0x88] sm:$0xff]
    %v278 = vld [vmem:[%s3 + $0x90] sm:$0xff]
    %v279 = vld [vmem:[%s3 + $0x98] sm:$0xff]
    %v280 = vld [vmem:[%s3 + $0xa0] sm:$0xff]
    %v281 = vld [vmem:[%s3 + $0xa8] sm:$0xff]
    %v282 = vld [vmem:[%s3 + $0xb0] sm:$0xff]
    %v283 = vld [vmem:[%s3 + $0xb8] sm:$0xff]
    %v284 = vld [vmem:[%s3 + $0xc0] sm:$0xff]
    %v285 = vld [vmem:[%s3 + $0xc8] sm:$0xff]
    %v286 = vld [vmem:[%s3 + $0xd0] sm:$0xff]
    %v287 = vld [vmem:[%s3 + $0xd8] sm:$0xff]
    %v288 = vld [vmem:[%s3 + $0xe0] sm:$0xff]
    %v289 = vld [vmem:[%s3 + $0xe8] sm:$0xff]
    %v290 = vld [vmem:[%s3 + $0xf0] sm:$0xff]
    %v291 = vld [vmem:[%s3 + $0xf8] sm:$0xff]
    %292 = vmatprep.subr.mxu0 %v261
    %293 = vmatpush1.msra.mxu0 %v260
    %294 = vmatprep.subr.mxu0 %v263
    %295 = vmatpush1.msra.mxu0 %v262
    %296 = vmatprep.subr.mxu0 %v265
    %297 = vmatpush1.msra.mxu0 %v264
    %298 = vmatprep.subr.mxu0 %v267
    %299 = vmatpush1.msra.mxu0 %v266
    %300 = vmatprep.subr.mxu0 %v269
    %301 = vmatpush1.msra.mxu0 %v268
    %302 = vmatprep.subr.mxu0 %v271
    %303 = vmatpush1.msra.mxu0 %v270
    %304 = vmatprep.subr.mxu0 %v273
    %305 = vmatpush1.msra.mxu0 %v272
    %306 = vmatprep.subr.mxu0 %v275
    %307 = vmatpush1.msra.mxu0 %v274
    %308 = vmatprep.subr.mxu0 %v277
    %309 = vmatpush1.msra.mxu0 %v276
    %310 = vmatprep.subr.mxu0 %v279
    %311 = vmatpush1.msra.mxu0 %v278
    %312 = vmatprep.subr.mxu0 %v281
    %313 = vmatpush1.msra.mxu0 %v280
    %314 = vmatprep.subr.mxu0 %v283
    %315 = vmatpush1.msra.mxu0 %v282
    %316 = vmatprep.subr.mxu0 %v285
    %317 = vmatpush1.msra.mxu0 %v284
    %318 = vmatprep.subr.mxu0 %v287
    %319 = vmatpush1.msra.mxu0 %v286
    %320 = vmatprep.subr.mxu0 %v289
    %321 = vmatpush1.msra.mxu0 %v288
    %322 = vmatprep.subr.mxu0 %v291
    %323 = vmatpush1.msra.mxu0 %v290
    %324 = vmatprep.subr.mxu0 0.0
    %325 = vmatpush1.msra.mxu0 0.0
    %326 = vmatprep.subr.mxu0 0.0
    %327 = vmatpush1.msra.mxu0 0.0
    %328 = vmatprep.subr.mxu0 0.0
    %329 = vmatpush1.msra.mxu0 0.0
    %330 = vmatprep.subr.mxu0 0.0
    %331 = vmatpush1.msra.mxu0 0.0
    %332 = vmatprep.subr.mxu0 0.0
    %333 = vmatpush1.msra.mxu0 0.0
    %334 = vmatprep.subr.mxu0 0.0
    %335 = vmatpush1.msra.mxu0 0.0
    %336 = vmatprep.subr.mxu0 0.0
    %337 = vmatpush1.msra.mxu0 0.0
    %338 = vmatprep.subr.mxu0 0.0
    %339 = vmatpush1.msra.mxu0 0.0
    %340 = vmatprep.subr.mxu0 0.0
    %341 = vmatpush1.msra.mxu0 0.0
    %342 = vmatprep.subr.mxu0 0.0
    %343 = vmatpush1.msra.mxu0 0.0
    %344 = vmatprep.subr.mxu0 0.0
    %345 = vmatpush1.msra.mxu0 0.0
    %346 = vmatprep.subr.mxu0 0.0
    %347 = vmatpush1.msra.mxu0 0.0
    %348 = vmatprep.subr.mxu0 0.0
    %349 = vmatpush1.msra.mxu0 0.0
    %350 = vmatprep.subr.mxu0 0.0
    %351 = vmatpush1.msra.mxu0 0.0
    %352 = vmatprep.subr.mxu0 0.0
    %353 = vmatpush1.msra.mxu0 0.0
    %354 = vmatprep.subr.mxu0 0.0
    %355 = vmatpush1.msra.mxu0 0.0
    %356 = vmatprep.mubr.f32.mxu0 0.0
    %357 = vmatmul.mubr.f32.gmra.mrb[0].mxu0 %v259
    %v358 = vpop.f32.mrb[0].mxu0
    %v359 = vadd.f32 0.0, %v358
    %v360 = vpop.f32.mrb[0].mxu0
    %v361 = vadd.f32 0.0, %v360
    %362 = vdwg.mxu0
    %v363 = vmax.f32 %v24, 1e-07
    %v364 = vmin.f32 %v363, 0.9999999
    %vm365 = vcmp.gt.f32.partialorder %v359, 0.5
    %v366 = vsub.f32 1.0, %v364
    %v367 = vsel %vm365, %v364, %v366
    %v368 = vlog2.pop %v367
    %v369 = vmul.f32 %v368, 0.6931472
    %v370 = vsub.f32 0.0, %v369
    %v371 = vmul.f32 %v370, %v361
    %v372 = vmul.f32 %v371, %v34
    %373 = vadd.xlane.f32.xlu0 %v372
    %v374 = vpop.xlane.xlu0 %373
    %v375 = vrot.slane %v374, 4
    %v376 = vadd.f32 %v374, %v375
    %v377 = vrot.slane %v376, 2
    %v378 = vadd.f32 %v376, %v377
    %v379 = vrot.slane %v378, 1
    %v380 = vadd.f32 %v378, %v379
    %s381 = vtos %v380
    %s382 = smul.f32 %s381, 0.25
    %s383 = scalar_lea.smem [#allocation2], 0
    %384 = sst [smem:[%s383]] %s382
    %vm385 = vcmp.gt.f32.partialorder %v25, 0.5
    %v386 = vsel %vm385, 1, 0
    %v387 = vlaneseq
    %v388 = vshrl.u32 %v387, 7
    %v389 = vsub.s32 1, %v388
    %v390 = vrot.slane %v386, %v389
    %vm391 = vcmp.eq.s32.totalorder %v390, 1
    %v392 = vsel %vm391, %v140, -inf
    %393 = vmax.xlane.f32.xlu0 %v392
    %v394 = vpop.xlane.xlu0 %393
    %vm395 = vcmp.ge.f32.partialorder %v392, %v394
    %v396 = vsel %vm395, %v29, 128.0
    %397 = vmin.xlane.f32.xlu0 %v396
    %v398 = vpop.xlane.xlu0 %397
    %vm399 = vcmp.eq.f32.partialorder %v29, %v398
    %v400 = vsel %vm399, 1, 0
    %v401 = vcvt.s32.f32 %v400
    %v402 = vlaneseq
    %v403 = vshrl.u32 %v402, 7
    %v404 = vsub.s32 2, %v403
    %v405 = vrot.slane %v25, %v404
    %v406 = vmul.f32 %v401, %v405
    %407 = vadd.xlane.f32.xlu0 %v406
    %v408 = vpop.xlane.xlu0 %407
    %v409 = vcvt.f32.s32.to.zero.pseudo %v408
    %vm410 = vcmask 7168
    %411 = vst.msk [vmem:[%s6] sm:$0xff] %vm410, %v409
    %412 = vst [vmem:[%s7] sm:$0xff] %v140
    // Predicated region
    $region22: #{relation_loss_forward.1} parent=1 // pred_check
      _
    $region23: #{relation_loss_forward.1} parent=1 // pred_check_branch
      %414 = sbr.rel (0) target = $region25
    $region24: #{relation_loss_forward.1} parent=1 // pred_region
      %s416 = ssub.s32 16, 16
      %417 = vsyncadd [#allocation3], %s416
      %420 = dma.smem_to_hbm [#allocation2], 16, %s5, [#allocation3]
    $region25: #{relation_loss_forward.1} parent=1 // pred_fallthru
      _
    // Predicated region
    $region26: #{relation_loss_forward.1} parent=1 // pred_check
      _
    $region27: #{relation_loss_forward.1} parent=1 // pred_check_branch
      %422 = sbr.rel (0) target = $region29
    $region28: #{relation_loss_forward.1} parent=1 // pred_region
      _
    $region29: #{relation_loss_forward.1} parent=1 // pred_fallthru
      _
    // Predicated region
    $region30: #{relation_loss_forward.1} parent=1 // pred_check
      _
    $region31: #{relation_loss_forward.1} parent=1 // pred_check_branch
      %424 = sbr.rel (0) target = $region33
    $region32: #{relation_loss_forward.1} parent=1 // pred_region
      _
    $region33: #{relation_loss_forward.1} parent=1 // pred_fallthru
      _
    // Predicated region
    $region34: #{relation_loss_forward.1} parent=1 // pred_check
      _
    $region35: #{relation_loss_forward.1} parent=1 // pred_check_branch
      %426 = sbr.rel (0) target = $region37
    $region36: #{relation_loss_forward.1} parent=1 // pred_region
      %427 = dma.done [#allocation3], 16
    $region37: #{relation_loss_forward.1} parent=1 // pred_fallthru
      _
    // Predicated region
    $region38: #{relation_loss_forward.1} parent=1 // pred_check
      _
    $region39: #{relation_loss_forward.1} parent=1 // pred_check_branch
      %429 = sbr.rel (0) target = $region41
    $region40: #{relation_loss_forward.1} parent=1 // pred_region
      _
    $region41: #{relation_loss_forward.1} parent=1 // pred_fallthru
      _
    // Predicated region
    $region42: #{relation_loss_forward.1} parent=1 // pred_check
      _
    $region43: #{relation_loss_forward.1} parent=1 // pred_check_branch
      %431 = sbr.rel (0) target = $region45
    $region44: #{relation_loss_forward.1} parent=1 // pred_region
      _
    $region45: #{relation_loss_forward.1} parent=1 // pred_fallthru
      _
    %432 = sfence
    %433 = vsyncpa [#allocation3], 1

</llo_original>
